<compile_context>
chip_gen: v7x
topology: tpu7x:2x2x1
jax: 0.10.0
libtpu: 0.0.40
codegen_flags: <defaults>
</compile_context>

<pallas_src>
import functools

import jax
import jax.numpy as jnp
from jax import lax
from jax.experimental import pallas as pl
from jax.experimental.pallas import tpu as pltpu

NEG_SLOPE_GAT = 0.2    # GATConv leaky-relu negative_slope
NEG_SLOPE_CNN = 0.01   # nn.LeakyReLU() default
MASK_VALUE = -1e30     # additive mask for non-edges (exp underflows to exactly 0)


def _round_up(a, b):
    return (a + b - 1) // b * b


def _tpu_config():
    """Returns (vmem_limit_bytes or None, use_bf16_score_path)."""
    vmem_limit = None
    try:
        cap = int(pltpu.get_tpu_info().vmem_capacity_bytes)
        # ~96-100 MiB on 128 MiB parts (v5e/v6e), ~48 MiB on 64 MiB parts (v7x).
        vmem_limit = min(cap * 3 // 4, 100 * 1024 * 1024)
    except Exception:
        vmem_limit = None   # fall back to the compiler's default scoped limit
    bf16 = True
    try:
        kind = jax.devices()[0].device_kind.lower()
        # v5e-class and older chips have no bf16 VPU/EUP -> keep score path in f32.
        if any(t in kind for t in ("v2", "v3", "v4", "v5e", "v5 lite", "v5litepod")):
            bf16 = False
    except Exception:
        pass
    return vmem_limit, bf16


def _derive_tm(s_pad, num_heads, head_dim, vmem_limit, bf16_scores):
    """Pick a destination-tile size from an explicit VMEM byte budget."""
    limit = vmem_limit if vmem_limit is not None else 32 * 1024 * 1024
    # Resident (constant-index) operands, double-buffered: feat bf16 + elt f32.
    resident = 2 * num_heads * s_pad * (head_dim * 2 + 4)
    # Per dst-row bytes: int8 mask (x2 buffers) + e slab (f32) + p slab (+ bf16 MXU copy).
    score_bytes = 4 + (2 if bf16_scores else 4) + 2
    per_row = s_pad * (2 * 1 + score_bytes) + 2 * 4 * num_heads * (1 + head_dim)
    budget = int(limit * 0.8) - resident - 4 * 1024 * 1024
    tm = budget // max(per_row, 1)
    tm = max(32, min(int(tm), 1024))
    return (tm // 32) * 32


# ---------------------------------------------------------------------------
# Fused multi-head GAT attention kernel, tiled over destination nodes.
# One grid step handles a [TM, S] slab of the score matrix for ALL heads:
#   e   = LeakyReLU(el[src] + er[dst]);  e = where(edge, e, -1e30)   (int8 mask select)
#   p   = exp(e - rowmax(e))          (bf16 exp on v6e/v7x; masked entries -> exactly 0)
#   rst = (p @ feat_h) * 1/rowsum(p)  (normalization deferred; MXU bf16 x bf16 -> f32)
# feat / el / er are precomputed once in the wrapper (hoisted out of the tile loop).
# ---------------------------------------------------------------------------
def _gat_fused_kernel(feat_ref, elt_ref, er_ref, mask_ref, out_ref, *,
                      num_heads, head_dim, negative_slope, apply_elu, bf16_scores):
    # feat_ref:[H,S,D] bf16  elt_ref:[H,S] f32  er_ref:[TM,H] f32
    # mask_ref:[TM,S] int8   out_ref:[TM,H*D] f32
    edge = mask_ref[...] != 0                                   # [TM,S] edge predicate
    for h in range(num_heads):                                  # H is 1-2: fully unrolled
        e = elt_ref[h:h + 1, :] + er_ref[:, h:h + 1]            # [TM,S] f32
        e = jnp.where(e > 0, e, negative_slope * e)             # LeakyReLU(0.2)
        e = jnp.where(edge, e, MASK_VALUE)                      # mask as select (no f32 bias slab)
        m = jnp.max(e, axis=-1, keepdims=True)
        d = e - m
        if bf16_scores:
            p = jnp.exp(d.astype(jnp.bfloat16))                 # bf16 exp on the EUP
        else:
            p = jnp.exp(d)                                      # f32 exp (v5e path)
        s = jnp.sum(p, axis=-1, keepdims=True, dtype=jnp.float32)
        rst = jnp.dot(p.astype(jnp.bfloat16), feat_ref[h],      # [TM,D] bf16 MXU, f32 acc
                      preferred_element_type=jnp.float32)
        rst = rst * pl.reciprocal(s, approx=False)              # deferred softmax norm
        if apply_elu:                                           # ELU (safe negative branch)
            rst = jnp.where(rst > 0, rst, jnp.exp(jnp.minimum(rst, 0.0)) - 1.0)
        out_ref[:, h * head_dim:(h + 1) * head_dim] = rst       # slice store (no concat)


def gat_layer(x, mask_i8, W, attn_l, attn_r, *, apply_elu, tm=None,
              bf16_scores=True, vmem_limit=None):
    """Dense multi-head GATConv.

    x:[N,Fin], mask_i8:[N,N] int8 {0,1} (mask[dst,src]), W:[Fin,H*D], attn_*:[H,D]
    -> [N, H*D] with heads already flattened (so the inter-layer flatten(1) is free).
    """
    N = x.shape[0]
    H, D = attn_l.shape
    S_pad = _round_up(N, 128)          # lane-dense source axis

    # Hoisted projection + attention logits: computed once, shared by every dst tile.
    feat = jnp.dot(x, W).reshape(N, H, D)                       # [N,H,D] f32
    elt = jnp.einsum('nhd,hd->hn', feat, attn_l)                # [H,N]  el (per src)
    er = jnp.einsum('nhd,hd->nh', feat, attn_r)                 # [N,H]  er (per dst)
    feat_b = feat.transpose(1, 0, 2).astype(jnp.bfloat16)       # [H,N,D] bf16 for MXU

    if tm is None:
        tm = _derive_tm(S_pad, H, D, vmem_limit, bf16_scores)
    tm = max(32, (int(tm) // 32) * 32)                          # int8 sublane tiling: x32
    tm = min(tm, _round_up(N, 32))
    n_pad = _round_up(N, tm)

    # Pad source (lane) axis to S_pad (extra columns are masked/zero) and dst axis to tm.
    feat_b = jnp.pad(feat_b, ((0, 0), (0, S_pad - N), (0, 0)))
    elt = jnp.pad(elt, ((0, 0), (0, S_pad - N)))
    er = jnp.pad(er, ((0, n_pad - N), (0, 0)))
    mask_p = jnp.pad(mask_i8, ((0, n_pad - N), (0, S_pad - N)))

    kernel = functools.partial(
        _gat_fused_kernel, num_heads=H, head_dim=D,
        negative_slope=NEG_SLOPE_GAT, apply_elu=apply_elu, bf16_scores=bf16_scores)
    out = pl.pallas_call(
        kernel,
        out_shape=jax.ShapeDtypeStruct((n_pad, H * D), jnp.float32),
        grid=(n_pad // tm,),
        in_specs=[
            pl.BlockSpec((H, S_pad, D), lambda i: (0, 0, 0)),   # feat, all heads (resident)
            pl.BlockSpec((H, S_pad), lambda i: (0, 0)),         # el row-vector per head
            pl.BlockSpec((tm, H), lambda i: (i, 0)),            # er for this dst tile
            pl.BlockSpec((tm, S_pad), lambda i: (i, 0)),        # int8 edge mask rows
        ],
        out_specs=pl.BlockSpec((tm, H * D), lambda i: (i, 0)),
        compiler_params=pltpu.CompilerParams(
            dimension_semantics=("parallel",),                  # dst tiles are independent
            vmem_limit_bytes=vmem_limit,
        ),
    )(feat_b, elt, er, mask_p)
    return out[:N]


# ---------------------------------------------------------------------------
# Path CNN head kernel: Conv(10->ch,(3,1)) + LeakyReLU + Conv(ch->1,(3,1)) + LeakyReLU.
# N*C stays on the lane axis (padded to x128); conv1 is an MXU matmul over transposed
# im2col patches, conv2 (1 x ch) is done as ch VPU FMAs with weights read from SMEM.
# ---------------------------------------------------------------------------
def _cnn_kernel(pt_ref, w1t_ref, b1_ref, w2_ref, b2_ref, out_ref, *, ch):
    # pt_ref:[3,3P,NCp] f32  w1t_ref:[ch,3P]  b1_ref:[ch,1]  w2_ref:[3,ch] SMEM
    # b2_ref:[1,1] SMEM      out_ref:[1,NCp]
    acc = jnp.zeros(out_ref.shape, jnp.float32)
    for i in range(3):                      # 3 output rows of conv1 == 3 taps of conv2
        hcv = jnp.dot(w1t_ref[...], pt_ref[i],
                      preferred_element_type=jnp.float32) + b1_ref[...]    # [ch, NCp]
        hcv = jnp.where(hcv > 0, hcv, NEG_SLOPE_CNN * hcv)                 # LeakyReLU
        for c in range(ch):                 # conv2 as VPU FMAs (off the MXU)
            acc = acc + w2_ref[i, c] * hcv[c:c + 1, :]
    acc = acc + b2_ref[0, 0]
    out_ref[...] = jnp.where(acc > 0, acc, NEG_SLOPE_CNN * acc)            # LeakyReLU


def path_cnn(logits, paths, w1, b1, w2, b2):
    """logits: [N, C] node logits, paths: [N, P, L] int32 -> [N, C]."""
    N, C = logits.shape
    _, P, L = paths.shape
    assert L == 5, "path length must be 5 (two valid (3,1) convs -> length 1)"
    ch = w1.shape[0]
    nc = N * C
    nc_pad = _round_up(nc, 128)

    # Gather + im2col in JAX glue (data-dependent gather stays outside the kernel).
    g = logits[paths]                                          # [N, P, L, C]
    gt = jnp.transpose(g, (2, 1, 0, 3)).reshape(L, P, nc)      # [L, P, NC]
    gt = jnp.pad(gt, ((0, 0), (0, 0), (0, nc_pad - nc)))       # lane-dense NC axis
    patches = jnp.stack([gt[i:i + 3].reshape(3 * P, nc_pad)    # row index = k*P + p
                         for i in range(3)], axis=0)           # [3, 3P, NCp]

    w1t = jnp.transpose(w1[:, :, :, 0], (0, 2, 1)).reshape(ch, 3 * P)     # [co, k*P+p]
    b1m = b1.reshape(ch, 1)
    w2m = jnp.transpose(w2[0, :, :, 0], (1, 0))                           # [3, ch]
    b2m = b2.reshape(1, 1)

    kernel = functools.partial(_cnn_kernel, ch=ch)
    out = pl.pallas_call(
        kernel,
        out_shape=jax.ShapeDtypeStruct((1, nc_pad), jnp.float32),
        grid=(1,),
        in_specs=[
            pl.BlockSpec((3, 3 * P, nc_pad), lambda i: (0, 0, 0)),
            pl.BlockSpec((ch, 3 * P), lambda i: (0, 0)),
            pl.BlockSpec((ch, 1), lambda i: (0, 0)),
            pl.BlockSpec(memory_space=pltpu.MemorySpace.SMEM),   # conv2 weights (scalars)
            pl.BlockSpec(memory_space=pltpu.MemorySpace.SMEM),   # conv2 bias (scalar)
        ],
        out_specs=pl.BlockSpec((1, nc_pad), lambda i: (0, 0)),
        compiler_params=pltpu.CompilerParams(dimension_semantics=("arbitrary",)),
    )(patches, w1t, b1m, w2m, b2m)
    return out[0, :nc].reshape(N, C)


# ---------------------------------------------------------------------------
# Full forward (GAT.forward)
# ---------------------------------------------------------------------------
def gat_gfcn_forward(x, adj, paths, params, *, tm=None):
    vmem_limit, bf16_scores = _tpu_config()
    # int8 edge mask computed ONCE, reused by every head and every layer.
    mask_i8 = (adj > 0).astype(jnp.int8)
    h = x
    gat_params = params['gat']
    num_layers = len(gat_params) - 1
    for l in range(num_layers):
        W, al, ar = gat_params[l]
        h = gat_layer(h, mask_i8, W, al, ar, apply_elu=True, tm=tm,
                      bf16_scores=bf16_scores, vmem_limit=vmem_limit)   # [N, H*D]
    W, al, ar = gat_params[-1]
    out = gat_layer(h, mask_i8, W, al, ar, apply_elu=False, tm=tm,
                    bf16_scores=bf16_scores, vmem_limit=vmem_limit)     # [N, H*C]
    H, C = al.shape
    logits = out.reshape(out.shape[0], H, C).mean(axis=1)               # .mean(1)
    return path_cnn(logits, paths, params['cnn_w1'], params['cnn_b1'],
                    params['cnn_w2'], params['cnn_b2'])


# ---------------------------------------------------------------------------
# Pure-JAX reference for correctness checking (full f32)
# ---------------------------------------------------------------------------
def _gat_layer_ref(x, adj, W, al, ar, apply_elu):
    N, _ = x.shape
    H, D = al.shape
    feat = (x @ W).reshape(N, H, D)
    el = jnp.sum(feat * al[None], axis=-1)          # [N, H]
    er = jnp.sum(feat * ar[None], axis=-1)          # [N, H]
    e = er[:, None, :] + el[None, :, :]             # [dst, src, H]
    e = jnp.where(e > 0, e, NEG_SLOPE_GAT * e)
    mask = (adj > 0)[:, :, None]
    e = jnp.where(mask, e, -1e30)
    e = e - jnp.max(e, axis=1, keepdims=True)
    p = jnp.where(mask, jnp.exp(e), 0.0)
    alpha = p / jnp.sum(p, axis=1, keepdims=True)
    rst = jnp.einsum('dsh,shk->dhk', alpha, feat)
    if apply_elu:
        rst = jnp.where(rst > 0, rst, jnp.exp(rst) - 1.0)
    return rst


def reference_forward(x, adj, paths, params):
    h = x
    gp = params['gat']
    for l in range(len(gp) - 1):
        W, al, ar = gp[l]
        h = _gat_layer_ref(h, adj, W, al, ar, True).reshape(h.shape[0], -1)
    W, al, ar = gp[-1]
    logits = _gat_layer_ref(h, adj, W, al, ar, False).mean(axis=1)

    g = logits[paths]                                # [N, 10, 5, C] == NCHW
    h1 = lax.conv_general_dilated(g, params['cnn_w1'], (1, 1), 'VALID',
                                  dimension_numbers=('NCHW', 'OIHW', 'NCHW'))
    h1 = h1 + params['cnn_b1'][None, :, None, None]
    h1 = jnp.where(h1 > 0, h1, NEG_SLOPE_CNN * h1)
    h2 = lax.conv_general_dilated(h1, params['cnn_w2'], (1, 1), 'VALID',
                                  dimension_numbers=('NCHW', 'OIHW', 'NCHW'))
    h2 = h2 + params['cnn_b2'][None, :, None, None]
    h2 = jnp.where(h2 > 0, h2, NEG_SLOPE_CNN * h2)
    return h2[:, 0, 0, :]


if __name__ == "__main__":
    N = 64
    IN_DIM = 8
    NUM_HIDDEN = 16
    NUM_CLASSES = 6          # citeseer has 6 classes
    HEADS = [2, 1]           # num_layers + 1 entries
    NUM_LAYERS = 1
    CNN_CH = 4
    NUM_PATHS = 10           # conv input channels
    PATH_LEN = 5

    key = jax.random.PRNGKey(0)
    keys = jax.random.split(key, 16)

    x = jax.random.normal(keys[0], (N, IN_DIM), jnp.float32)
    adj = (jax.random.uniform(keys[1], (N, N)) < 0.25).astype(jnp.float32)
    adj = jnp.maximum(adj, jnp.eye(N, dtype=jnp.float32))      # self loops
    paths = jax.random.randint(keys[2], (N, NUM_PATHS, PATH_LEN), 0, N, dtype=jnp.int32)

    # GAT layer shapes (mirrors GAT.__init__)
    layer_specs = [(IN_DIM, NUM_HIDDEN, HEADS[0])]
    for l in range(1, NUM_LAYERS):
        layer_specs.append((NUM_HIDDEN * HEADS[l - 1], NUM_HIDDEN, HEADS[l]))
    layer_specs.append((NUM_HIDDEN * HEADS[-2], NUM_CLASSES, HEADS[-1]))

    gat_params = []
    kidx = 3
    for (fin, d, h) in layer_specs:
        W = 0.2 * jax.random.normal(keys[kidx], (fin, h * d), jnp.float32)
        al = 0.2 * jax.random.normal(keys[kidx + 1], (h, d), jnp.float32)
        ar = 0.2 * jax.random.normal(keys[kidx + 2], (h, d), jnp.float32)
        gat_params.append((W, al, ar))
        kidx += 3

    w1 = 0.2 * jax.random.normal(keys[kidx], (CNN_CH, NUM_PATHS, 3, 1), jnp.float32)
    b1 = 0.1 * jax.random.normal(keys[kidx + 1], (CNN_CH,), jnp.float32)
    w2 = 0.2 * jax.random.normal(keys[kidx + 2], (1, CNN_CH, 3, 1), jnp.float32)
    b2 = 0.1 * jax.random.normal(keys[kidx + 3], (1,), jnp.float32)

    params = {'gat': gat_params, 'cnn_w1': w1, 'cnn_b1': b1,
              'cnn_w2': w2, 'cnn_b2': b2}

    ref = reference_forward(x, adj, paths, params)

    # tm=32 at this toy size exercises the multi-tile (grid > 1) destination-axis path.
    out = gat_gfcn_forward(x, adj, paths, params, tm=32)
    out = jax.block_until_ready(out)
    assert out.shape == (N, NUM_CLASSES), out.shape
    max_err = float(jnp.max(jnp.abs(out - ref)))
    assert max_err < 2e-2, f"mismatch vs reference (tm=32), max_err={max_err}"

    # Auto-derived tile size (VMEM-budget path), grid == 1 at this size.
    out_auto = gat_gfcn_forward(x, adj, paths, params, tm=None)
    out_auto = jax.block_until_ready(out_auto)
    max_err_auto = float(jnp.max(jnp.abs(out_auto - ref)))
    assert max_err_auto < 2e-2, f"mismatch vs reference (auto tm), max_err={max_err_auto}"

    print("KERNEL_OK")
</pallas_src>

<mosaic_0001>
module attributes {stable_mosaic.version = 11 : i64} {
  func.func @_gat_fused_kernel(%arg0: i32, %arg1: memref<2x128x16xbf16, #tpu.memory_space<vmem>>, %arg2: memref<2x128xf32, #tpu.memory_space<vmem>>, %arg3: memref<32x2xf32, #tpu.memory_space<vmem>>, %arg4: memref<32x128xi8, #tpu.memory_space<vmem>>, %arg5: memref<32x32xf32, #tpu.memory_space<vmem>>) attributes {dimension_semantics = [#tpu.dimension_semantics<parallel>], iteration_bounds = array<i64: 2>, scalar_prefetch = 0 : i64, scratch_operands = 0 : i64, tpu.core_type = #tpu.core_type<tc>, window_params = [{pipeline_mode = #tpu.pipeline_mode<synchronous>, transform_indices = @transform_0, window_bounds = array<i64: 2, 128, 16>}, {pipeline_mode = #tpu.pipeline_mode<synchronous>, transform_indices = @transform_1, window_bounds = array<i64: 2, 128>}, {transform_indices = @transform_2, window_bounds = array<i64: 32, 2>}, {transform_indices = @transform_3, window_bounds = array<i64: 32, 128>}, {transform_indices = @transform_4, window_bounds = array<i64: 32, 32>}]} {
    %c0 = arith.constant 0 : index
    %c0_0 = arith.constant 0 : index
    %0 = vector.load %arg4[%c0, %c0_0] : memref<32x128xi8, #tpu.memory_space<vmem>>, vector<32x128xi8>
    %c0_i8 = arith.constant 0 : i8
    %1 = vector.broadcast %c0_i8 : i8 to vector<32x128xi8>
    %2 = arith.cmpi ne, %0, %1 : vector<32x128xi8>
    %c0_1 = arith.constant 0 : index
    %c0_2 = arith.constant 0 : index
    %3 = vector.load %arg2[%c0_1, %c0_2] : memref<2x128xf32, #tpu.memory_space<vmem>>, vector<1x128xf32>
    %c0_3 = arith.constant 0 : index
    %c0_4 = arith.constant 0 : index
    %4 = vector.load %arg3[%c0_3, %c0_4] : memref<32x2xf32, #tpu.memory_space<vmem>>, vector<32x1xf32>
    %5 = vector.broadcast %3 : vector<1x128xf32> to vector<32x128xf32>
    %6 = vector.broadcast %4 : vector<32x1xf32> to vector<32x128xf32>
    %7 = arith.addf %5, %6 : vector<32x128xf32>
    %cst = arith.constant 0.000000e+00 : f32
    %8 = vector.broadcast %cst : f32 to vector<32x128xf32>
    %9 = arith.cmpf ogt, %7, %8 : vector<32x128xf32>
    %cst_5 = arith.constant 2.000000e-01 : f32
    %10 = vector.broadcast %cst_5 : f32 to vector<32x128xf32>
    %11 = arith.mulf %10, %7 : vector<32x128xf32>
    %12 = arith.select %9, %7, %11 : vector<32x128xi1>, vector<32x128xf32>
    %cst_6 = arith.constant -1.000000e+30 : f32
    %13 = vector.broadcast %cst_6 : f32 to vector<32x128xf32>
    %14 = arith.select %2, %12, %13 : vector<32x128xi1>, vector<32x128xf32>
    %cst_7 = arith.constant dense<0xFF800000> : vector<32xf32>
    %15 = vector.multi_reduction <maximumf>, %14, %cst_7 [1] : vector<32x128xf32> to vector<32xf32>
    %16 = vector.shape_cast %15 : vector<32xf32> to vector<32x1xf32>
    %17 = vector.broadcast %16 : vector<32x1xf32> to vector<32x128xf32>
    %18 = arith.subf %14, %17 : vector<32x128xf32>
    %19 = arith.truncf %18 : vector<32x128xf32> to vector<32x128xbf16>
    %20 = math.exp %19 : vector<32x128xbf16>
    %21 = arith.extf %20 : vector<32x128xbf16> to vector<32x128xf32>
    %cst_8 = arith.constant dense<0.000000e+00> : vector<32xf32>
    %22 = vector.multi_reduction <add>, %21, %cst_8 [1] : vector<32x128xf32> to vector<32xf32>
    %23 = vector.shape_cast %22 : vector<32xf32> to vector<32x1xf32>
    %c0_9 = arith.constant 0 : index
    %c0_10 = arith.constant 0 : index
    %c0_11 = arith.constant 0 : index
    %24 = vector.load %arg1[%c0_9, %c0_10, %c0_11] : memref<2x128x16xbf16, #tpu.memory_space<vmem>>, vector<1x128x16xbf16>
    %25 = vector.shape_cast %24 : vector<1x128x16xbf16> to vector<128x16xbf16>
    %cst_12 = arith.constant dense<0.000000e+00> : vector<32x16xf32>
    %26 = tpu.matmul %20, %25, %cst_12 {dimension_numbers = #tpu.dot_dimension_numbers<[1], [0], [0], [1], [0, 0, 1, 1], [], []>} : vector<32x128xbf16>, vector<128x16xbf16>, vector<32x16xf32> -> vector<32x16xf32>
    %27 = tpu.reciprocal %23 : vector<32x1xf32> -> vector<32x1xf32>
    %28 = vector.broadcast %27 : vector<32x1xf32> to vector<32x16xf32>
    %29 = arith.mulf %26, %28 : vector<32x16xf32>
    %cst_13 = arith.constant 0.000000e+00 : f32
    %30 = vector.broadcast %cst_13 : f32 to vector<32x16xf32>
    %31 = arith.cmpf ogt, %29, %30 : vector<32x16xf32>
    %cst_14 = arith.constant 0.000000e+00 : f32
    %32 = vector.broadcast %cst_14 : f32 to vector<32x16xf32>
    %33 = arith.minimumf %29, %32 : vector<32x16xf32>
    %34 = math.exp %33 : vector<32x16xf32>
    %cst_15 = arith.constant 1.000000e+00 : f32
    %35 = vector.broadcast %cst_15 : f32 to vector<32x16xf32>
    %36 = arith.subf %34, %35 : vector<32x16xf32>
    %37 = arith.select %31, %29, %36 : vector<32x16xi1>, vector<32x16xf32>
    %c0_16 = arith.constant 0 : index
    %c0_17 = arith.constant 0 : index
    %38 = vector.load %arg5[%c0_16, %c0_17] : memref<32x32xf32, #tpu.memory_space<vmem>>, vector<32x16xf32>
    tpu.vector_store %arg5[%c0_16, %c0_17], %37 {strides = array<i32>} : memref<32x32xf32, #tpu.memory_space<vmem>>, vector<32x16xf32>,
    %c1 = arith.constant 1 : index
    %c0_18 = arith.constant 0 : index
    %39 = vector.load %arg2[%c1, %c0_18] : memref<2x128xf32, #tpu.memory_space<vmem>>, vector<1x128xf32>
    %c0_19 = arith.constant 0 : index
    %c1_20 = arith.constant 1 : index
    %40 = vector.load %arg3[%c0_19, %c1_20] : memref<32x2xf32, #tpu.memory_space<vmem>>, vector<32x1xf32>
    %41 = vector.broadcast %39 : vector<1x128xf32> to vector<32x128xf32>
    %42 = vector.broadcast %40 : vector<32x1xf32> to vector<32x128xf32>
    %43 = arith.addf %41, %42 : vector<32x128xf32>
    %cst_21 = arith.constant 0.000000e+00 : f32
    %44 = vector.broadcast %cst_21 : f32 to vector<32x128xf32>
    %45 = arith.cmpf ogt, %43, %44 : vector<32x128xf32>
    %cst_22 = arith.constant 2.000000e-01 : f32
    %46 = vector.broadcast %cst_22 : f32 to vector<32x128xf32>
    %47 = arith.mulf %46, %43 : vector<32x128xf32>
    %48 = arith.select %45, %43, %47 : vector<32x128xi1>, vector<32x128xf32>
    %cst_23 = arith.constant -1.000000e+30 : f32
    %49 = vector.broadcast %cst_23 : f32 to vector<32x128xf32>
    %50 = arith.select %2, %48, %49 : vector<32x128xi1>, vector<32x128xf32>
    %cst_24 = arith.constant dense<0xFF800000> : vector<32xf32>
    %51 = vector.multi_reduction <maximumf>, %50, %cst_24 [1] : vector<32x128xf32> to vector<32xf32>
    %52 = vector.shape_cast %51 : vector<32xf32> to vector<32x1xf32>
    %53 = vector.broadcast %52 : vector<32x1xf32> to vector<32x128xf32>
    %54 = arith.subf %50, %53 : vector<32x128xf32>
    %55 = arith.truncf %54 : vector<32x128xf32> to vector<32x128xbf16>
    %56 = math.exp %55 : vector<32x128xbf16>
    %57 = arith.extf %56 : vector<32x128xbf16> to vector<32x128xf32>
    %cst_25 = arith.constant dense<0.000000e+00> : vector<32xf32>
    %58 = vector.multi_reduction <add>, %57, %cst_25 [1] : vector<32x128xf32> to vector<32xf32>
    %59 = vector.shape_cast %58 : vector<32xf32> to vector<32x1xf32>
    %c1_26 = arith.constant 1 : index
    %c0_27 = arith.constant 0 : index
    %c0_28 = arith.constant 0 : index
    %60 = vector.load %arg1[%c1_26, %c0_27, %c0_28] : memref<2x128x16xbf16, #tpu.memory_space<vmem>>, vector<1x128x16xbf16>
    %61 = vector.shape_cast %60 : vector<1x128x16xbf16> to vector<128x16xbf16>
    %cst_29 = arith.constant dense<0.000000e+00> : vector<32x16xf32>
    %62 = tpu.matmul %56, %61, %cst_29 {dimension_numbers = #tpu.dot_dimension_numbers<[1], [0], [0], [1], [0, 0, 1, 1], [], []>} : vector<32x128xbf16>, vector<128x16xbf16>, vector<32x16xf32> -> vector<32x16xf32>
    %63 = tpu.reciprocal %59 : vector<32x1xf32> -> vector<32x1xf32>
    %64 = vector.broadcast %63 : vector<32x1xf32> to vector<32x16xf32>
    %65 = arith.mulf %62, %64 : vector<32x16xf32>
    %cst_30 = arith.constant 0.000000e+00 : f32
    %66 = vector.broadcast %cst_30 : f32 to vector<32x16xf32>
    %67 = arith.cmpf ogt, %65, %66 : vector<32x16xf32>
    %cst_31 = arith.constant 0.000000e+00 : f32
    %68 = vector.broadcast %cst_31 : f32 to vector<32x16xf32>
    %69 = arith.minimumf %65, %68 : vector<32x16xf32>
    %70 = math.exp %69 : vector<32x16xf32>
    %cst_32 = arith.constant 1.000000e+00 : f32
    %71 = vector.broadcast %cst_32 : f32 to vector<32x16xf32>
    %72 = arith.subf %70, %71 : vector<32x16xf32>
    %73 = arith.select %67, %65, %72 : vector<32x16xi1>, vector<32x16xf32>
    %c0_33 = arith.constant 0 : index
    %c16 = arith.constant 16 : index
    %74 = vector.load %arg5[%c0_33, %c16] : memref<32x32xf32, #tpu.memory_space<vmem>>, vector<32x16xf32>
    tpu.vector_store %arg5[%c0_33, %c16], %73 {strides = array<i32>} : memref<32x32xf32, #tpu.memory_space<vmem>>, vector<32x16xf32>,
    return
  }
  func.func @transform_0(%arg0: i32) -> (i32, i32, i32) {
    %c0_i32 = arith.constant 0 : i32
    %c0_i32_0 = arith.constant 0 : i32
    %c0_i32_1 = arith.constant 0 : i32
    %c0_i32_2 = arith.constant 0 : i32
    return %c0_i32, %c0_i32_0, %c0_i32_1 : i32, i32, i32
  }
  func.func @transform_1(%arg0: i32) -> (i32, i32) {
    %c0_i32 = arith.constant 0 : i32
    %c0_i32_0 = arith.constant 0 : i32
    %c0_i32_1 = arith.constant 0 : i32
    return %c0_i32, %c0_i32_0 : i32, i32
  }
  func.func @transform_2(%arg0: i32) -> (i32, i32) {
    %c0_i32 = arith.constant 0 : i32
    %c0_i32_0 = arith.constant 0 : i32
    return %arg0, %c0_i32 : i32, i32
  }
  func.func @transform_3(%arg0: i32) -> (i32, i32) {
    %c0_i32 = arith.constant 0 : i32
    %c0_i32_0 = arith.constant 0 : i32
    return %arg0, %c0_i32 : i32, i32
  }
  func.func @transform_4(%arg0: i32) -> (i32, i32) {
    %c0_i32 = arith.constant 0 : i32
    %c0_i32_0 = arith.constant 0 : i32
    return %arg0, %c0_i32 : i32, i32
  }
}

</mosaic_0001>

<llo_original>
// kernel: tpu_custom_call.1
$region0: #{tpu_custom_call.1}
  #allocation0 [shape = 'u32[]', space=smem, size = 0x4, offset = 0x4, fixed_abs, tag = 'smem constant byte address 0x4 - core index']
  #allocation1 [shape = 'u32[144,128]{1,0:T(1,128)}', space=vmem, size = 0x12000, scoped, tag = 'internal scratch']
  %s0 = inlined_call_operand.vmem [shape: bf16[2,128,16], index: 0, kind: input, shape index: {}]
  %s1 = inlined_call_operand.vmem [shape: f32[2,128], index: 1, kind: input, shape index: {}]
  %s2 = inlined_call_operand.vmem [shape: f32[64,2], index: 2, kind: input, shape index: {}]
  %s3 = inlined_call_operand.vmem [shape: s8[64,128], index: 3, kind: input, shape index: {}]
  %s4 = inlined_call_operand.vmem [shape: f32[64,32], index: 4, kind: output, shape index: {}]
  %s5 = sld [smem:[#allocation0]]
  $region49: #{tpu_custom_call.1} parent=0
    _
  %s7 = ssub.s32 1, %s5
  %s8 = scalar_select 0, %s7, %s5
  loop: start=0, step=1, limit=4
  $region2: #{tpu_custom_call.1} parent=0 // loop_pre_header
    _
  $region3: #{tpu_custom_call.1} parent=0 // loop_header
    %s10 = sphi 0, %s14
    %p11 = scmp.ge.s32.totalorder %s10, 4
    %s18 = sphi 0, %s18
    %s20 = sphi 0, %s18
    %s21 = sphi 0, %s20
    %s35 = sphi 0, %s21
    %s39 = sphi 0, %s39
    %s41 = sphi 0, %s39
    %s42 = sphi 0, %s41
    %s56 = sphi 0, %s42
    %s62 = sphi 0, %s64
    %s65 = sphi 0, %s62
    %s66 = sphi 0, %s65
    %s82 = sphi 0, %s66
    %s88 = sphi 0, %s90
    %s91 = sphi 0, %s88
    %s92 = sphi 0, %s91
    %s108 = sphi 0, %s92
    %s114 = sphi 0, %s116
    %s117 = sphi 0, %s114
    %s118 = sphi 0, %s117
    %s134 = sphi 0, %s118
  $region4: #{tpu_custom_call.1} parent=0 // loop_header_branch
    %13 = sbr.rel (%p11) target = $region8
  $region5: #{tpu_custom_call.1} parent=0 // loop_body
    %s15 = ssub.s32 %s10, 1
    %s16 = ssub.s32 %s10, 2
    %s17 = sadd.s32 %s10, 1
    %s19 = sadd.s32 %s18, 1
    %p22 = scmp.eq.s32.totalorder %s10, 1
    %p23 = scmp.ne.s32.totalorder %s18, %s20
    %p24 = scmp.eq.s32.totalorder %s10, 0
    %p25 = por %p23, %p24
    %p26 = scmp.ne.s32.totalorder %s18, %s20
    %p27 = scmp.eq.s32.totalorder %s15, 1
    %p28 = por %p26, %p27
    %p29 = scmp.ne.s32.totalorder %s20, %s21
    %p30 = scmp.eq.s32.totalorder %s15, 0
    %p31 = por %p29, %p30
    %p32 = scmp.ne.s32.totalorder %s20, %s21
    %p33 = scmp.eq.s32.totalorder %s16, 1
    %p34 = por %p32, %p33
    %p36 = scmp.ne.s32.totalorder %s21, %s35
    %p37 = scmp.eq.s32.totalorder %s16, 0
    %p38 = por %p36, %p37
    %s40 = sadd.s32 %s39, 1
    %p43 = scmp.eq.s32.totalorder %s10, 1
    %p44 = scmp.ne.s32.totalorder %s39, %s41
    %p45 = scmp.eq.s32.totalorder %s10, 0
    %p46 = por %p44, %p45
    %p47 = scmp.ne.s32.totalorder %s39, %s41
    %p48 = scmp.eq.s32.totalorder %s15, 1
    %p49 = por %p47, %p48
    %p50 = scmp.ne.s32.totalorder %s41, %s42
    %p51 = scmp.eq.s32.totalorder %s15, 0
    %p52 = por %p50, %p51
    %p53 = scmp.ne.s32.totalorder %s41, %s42
    %p54 = scmp.eq.s32.totalorder %s16, 1
    %p55 = por %p53, %p54
    %p57 = scmp.ne.s32.totalorder %s42, %s56
    %p58 = scmp.eq.s32.totalorder %s16, 0
    %p59 = por %p57, %p58
    %s60 = ssub.s32 %s10, %s17
    %p61 = scmp.eq.s32.totalorder %s60, 0
    %s63 = sadd.s32 %s62, 1
    %s64 = scalar_select %p61, %s62, %s63
    %p67 = pneg %p61
    %p68 = scmp.eq.s32.totalorder %s10, 1
    %p69 = por %p67, %p68
    %p70 = scmp.ne.s32.totalorder %s62, %s65
    %p71 = scmp.eq.s32.totalorder %s10, 0
    %p72 = por %p70, %p71
    %p73 = scmp.ne.s32.totalorder %s62, %s65
    %p74 = scmp.eq.s32.totalorder %s15, 1
    %p75 = por %p73, %p74
    %p76 = scmp.ne.s32.totalorder %s65, %s66
    %p77 = scmp.eq.s32.totalorder %s15, 0
    %p78 = por %p76, %p77
    %p79 = scmp.ne.s32.totalorder %s65, %s66
    %p80 = scmp.eq.s32.totalorder %s16, 1
    %p81 = por %p79, %p80
    %p83 = scmp.ne.s32.totalorder %s66, %s82
    %p84 = scmp.eq.s32.totalorder %s16, 0
    %p85 = por %p83, %p84
    %s86 = ssub.s32 %s10, %s17
    %p87 = scmp.eq.s32.totalorder %s86, 0
    %s89 = sadd.s32 %s88, 1
    %s90 = scalar_select %p87, %s88, %s89
    %p93 = pneg %p87
    %p94 = scmp.eq.s32.totalorder %s10, 1
    %p95 = por %p93, %p94
    %p96 = scmp.ne.s32.totalorder %s88, %s91
    %p97 = scmp.eq.s32.totalorder %s10, 0
    %p98 = por %p96, %p97
    %p99 = scmp.ne.s32.totalorder %s88, %s91
    %p100 = scmp.eq.s32.totalorder %s15, 1
    %p101 = por %p99, %p100
    %p102 = scmp.ne.s32.totalorder %s91, %s92
    %p103 = scmp.eq.s32.totalorder %s15, 0
    %p104 = por %p102, %p103
    %p105 = scmp.ne.s32.totalorder %s91, %s92
    %p106 = scmp.eq.s32.totalorder %s16, 1
    %p107 = por %p105, %p106
    %p109 = scmp.ne.s32.totalorder %s92, %s108
    %p110 = scmp.eq.s32.totalorder %s16, 0
    %p111 = por %p109, %p110
    %s112 = ssub.s32 %s10, %s17
    %p113 = scmp.eq.s32.totalorder %s112, 0
    %s115 = sadd.s32 %s114, 1
    %s116 = scalar_select %p113, %s114, %s115
    %p119 = pneg %p113
    %p120 = scmp.eq.s32.totalorder %s10, 1
    %p121 = por %p119, %p120
    %p122 = scmp.ne.s32.totalorder %s114, %s117
    %p123 = scmp.eq.s32.totalorder %s10, 0
    %p124 = por %p122, %p123
    %p125 = scmp.ne.s32.totalorder %s114, %s117
    %p126 = scmp.eq.s32.totalorder %s15, 1
    %p127 = por %p125, %p126
    %p128 = scmp.ne.s32.totalorder %s117, %s118
    %p129 = scmp.eq.s32.totalorder %s15, 0
    %p130 = por %p128, %p129
    %p131 = scmp.ne.s32.totalorder %s117, %s118
    %p132 = scmp.eq.s32.totalorder %s16, 1
    %p133 = por %p131, %p132
    %p135 = scmp.ne.s32.totalorder %s118, %s134
    %p136 = scmp.eq.s32.totalorder %s16, 0
    %p137 = por %p135, %p136
    %p138 = scmp.le.s32.totalorder 1, %s10
    %p139 = scmp.lt.s32.totalorder %s10, 3
    %p140 = pnand %p138, %p139
    %p141 = pneg %p140
    // Predicated region
    $region9: #{tpu_custom_call.1} parent=5 // pred_check
      _
    $region10: #{tpu_custom_call.1} parent=5 // pred_check_branch
      %143 = sbr.rel (%p140) target = $region12
    $region11: #{tpu_custom_call.1} parent=5 // pred_region
      %s144 = ssub.s32 %s10, 1
      // Predicated region
      $region13: #{tpu_custom_call.1} parent=11 // pred_check
        %p145 = pneg %p31
      $region14: #{tpu_custom_call.1} parent=11 // pred_check_branch
        %147 = sbr.rel (%p145) target = $region16
      $region15: #{tpu_custom_call.1} parent=11 // pred_region
        _
      $region16: #{tpu_custom_call.1} parent=11 // pred_fallthru
        _
      // Predicated region
      $region17: #{tpu_custom_call.1} parent=11 // pred_check
        %p148 = pneg %p52
      $region18: #{tpu_custom_call.1} parent=11 // pred_check_branch
        %150 = sbr.rel (%p148) target = $region20
      $region19: #{tpu_custom_call.1} parent=11 // pred_region
        _
      $region20: #{tpu_custom_call.1} parent=11 // pred_fallthru
        _
    $region12: #{tpu_custom_call.1} parent=5 // pred_fallthru
      _
    %p151 = scmp.lt.s32.totalorder %s10, 2
    // Predicated region
    $region21: #{tpu_custom_call.1} parent=5 // pred_check
      %p152 = pneg %p151
    $region22: #{tpu_custom_call.1} parent=5 // pred_check_branch
      %154 = sbr.rel (%p152) target = $region24
    $region23: #{tpu_custom_call.1} parent=5 // pred_region
      // Predicated region
      $region25: #{tpu_custom_call.1} parent=23 // pred_check
        %p155 = pneg %p72
      $region26: #{tpu_custom_call.1} parent=23 // pred_check_branch
        %157 = sbr.rel (%p155) target = $region28
      $region27: #{tpu_custom_call.1} parent=23 // pred_region
        %s158 = smul.u32 4, %s10
        %p159 = scmp.lt.s32.totalorder %s158, 7
        %s160 = scalar_select %p159, %s158, 7
        %s161 = smul.addr %s160, 8
        %s162 = scalar_lea.vmem %s2, %s161
        %s163 = smul.u32 4, %s10
      $region28: #{tpu_custom_call.1} parent=23 // pred_fallthru
        _
      // Predicated region
      $region29: #{tpu_custom_call.1} parent=23 // pred_check
        %p164 = pneg %p98
      $region30: #{tpu_custom_call.1} parent=23 // pred_check_branch
        %166 = sbr.rel (%p164) target = $region32
      $region31: #{tpu_custom_call.1} parent=23 // pred_region
        %p167 = scmp.lt.s32.totalorder %s10, 1
        %s168 = scalar_select %p167, %s10, 1
        %s169 = smul.addr %s168, 8
        %s170 = scalar_lea.vmem %s3, %s169
      $region32: #{tpu_custom_call.1} parent=23 // pred_fallthru
        _
    $region24: #{tpu_custom_call.1} parent=5 // pred_fallthru
      _
    %p171 = scmp.le.s32.totalorder 1, %s10
    %p172 = scmp.lt.s32.totalorder %s10, 3
    %p173 = pnand %p171, %p172
    %p174 = pneg %p173
    // Predicated region
    $region33: #{tpu_custom_call.1} parent=5 // pred_check
      _
    $region34: #{tpu_custom_call.1} parent=5 // pred_check_branch
      %176 = sbr.rel (%p173) target = $region36
    $region35: #{tpu_custom_call.1} parent=5 // pred_region
      %s177 = ssub.s32 %s10, 1
      %p178 = pneg %p31
      %p179 = pneg %p28
      %p180 = pneg %p52
      %p181 = pneg %p49
      %s182 = smul.u32 4, %s15
      %p183 = scmp.lt.s32.totalorder %s182, 7
      %s184 = scalar_select %p183, %s182, 7
      %s185 = smul.addr %s184, 8
      %s186 = scalar_lea.vmem %s2, %s185
      %p187 = pneg %p78
      %p188 = pneg %p75
      %p189 = scmp.lt.s32.totalorder %s15, 1
      %s190 = scalar_select %p189, %s15, 1
      %s191 = smul.addr %s190, 8
      %s192 = scalar_lea.vmem %s3, %s191
      %p193 = pneg %p104
      %p194 = pneg %p101
      %p195 = pneg %p130
      %p196 = pneg %p127
      %s197 = smul.u32 4, %s15
      %p198 = scmp.lt.s32.totalorder %s197, 7
      %s199 = scalar_select %p198, %s197, 7
      %s200 = smul.addr %s199, 8
      %s201 = scalar_lea.vmem %s4, %s200
      %s202 = smul.u32 4, %s15
      %p203 = scmp.lt.s32.totalorder %s202, 7
      %s204 = scalar_select %p203, %s202, 7
      %s205 = smul.addr %s204, 8
      %s206 = scalar_lea.vmem %s2, %s205
      %s207 = smul.u32 4, %s15
      %p208 = scmp.lt.s32.totalorder %s15, 1
      %s209 = scalar_select %p208, %s15, 1
      %s210 = smul.addr %s209, 8
      %s211 = scalar_lea.vmem %s3, %s210
      %s212 = smul.u32 4, %s15
      %p213 = scmp.lt.s32.totalorder %s212, 7
      %s214 = scalar_select %p213, %s212, 7
      %s215 = smul.addr %s214, 8
      %s216 = scalar_lea.vmem %s4, %s215
      %s217 = smul.u32 4, %s15
      %v221 = vld [vmem:[%s211] sm:$0xff]
      %vm222 = vnez %v221
      %v223 = vld [vmem:[%s1] sm:$0x1]
      %v224 = vld [vmem:[%s206] sm:$0xff]
      %v225 = vld [vmem:[%s206 + $0x8] sm:$0xff]
      %v226 = vld [vmem:[%s206 + $0x10] sm:$0xff]
      %v227 = vld [vmem:[%s206 + $0x18] sm:$0xff]
      %v228 = vlaneseq
      %v229 = vshrl.u32 %v228, 7
      %v230 = vsub.s32 0, %v229
      %v231 = vrot.slane %v223, %v230
      %233 = vset.pattern.permute.xlu0 0
      %234 = vperm.xlu0 %233, %v224
      %v235 = vpop.permute.xlu0 %234
      %238 = vset.pattern.permute.xlu0 0
      %239 = vperm.xlu0 %238, %v225
      %v240 = vpop.permute.xlu0 %239
      %243 = vset.pattern.permute.xlu0 0
      %244 = vperm.xlu0 %243, %v226
      %v245 = vpop.permute.xlu0 %244
      %248 = vset.pattern.permute.xlu0 0
      %249 = vperm.xlu0 %248, %v227
      %v250 = vpop.permute.xlu0 %249
      %v252 = vadd.f32 %v231, %v235
      %v253 = vadd.f32 %v231, %v240
      %v254 = vadd.f32 %v231, %v245
      %v255 = vadd.f32 %v231, %v250
      %vm256 = vcmp.gt.f32.partialorder %v252, 0.0
      %vm257 = vcmp.gt.f32.partialorder %v253, 0.0
      %vm258 = vcmp.gt.f32.partialorder %v254, 0.0
      %vm259 = vcmp.gt.f32.partialorder %v255, 0.0
      %v260 = vmul.f32 %v252, 0.2
      %v261 = vmul.f32 %v253, 0.2
      %v262 = vmul.f32 %v254, 0.2
      %v263 = vmul.f32 %v255, 0.2
      %v264 = vsel %vm256, %v252, %v260
      %v265 = vsel %vm257, %v253, %v261
      %v266 = vsel %vm258, %v254, %v262
      %v267 = vsel %vm259, %v255, %v263
      %v268 = vsel %vm222, 16843009, 0
      %v269 = vunpack.c.0.s8 %v268
      %v270 = vunpack.c.1.s8 %v268
      %v271 = vunpack.c.2.s8 %v268
      %v272 = vunpack.c.3.s8 %v268
      %v273 = vpack.c.b16 %v269, %v269
      %v274 = vpack.c.b8 %v273, %v273
      %v275 = vpack.c.b16 %v270, %v270
      %v276 = vpack.c.b8 %v275, %v275
      %v277 = vpack.c.b16 %v271, %v271
      %v278 = vpack.c.b8 %v277, %v277
      %v279 = vpack.c.b16 %v272, %v272
      %v280 = vpack.c.b8 %v279, %v279
      %vm281 = vnez %v274
      %vm282 = vnez %v276
      %vm283 = vnez %v278
      %vm284 = vnez %v280
      %v285 = vsel %vm281, 16843009, 0
      %v286 = vsel %vm282, 16843009, 0
      %v287 = vsel %vm283, 16843009, 0
      %v288 = vsel %vm284, 16843009, 0
      %v289 = vunpack.c.0.s8 %v285
      %v290 = vunpack.c.0.s8 %v286
      %v291 = vunpack.c.0.s8 %v287
      %v292 = vunpack.c.0.s8 %v288
      %vm293 = vcmp.ne.s32.totalorder %v289, 0
      %vm294 = vcmp.ne.s32.totalorder %v290, 0
      %vm295 = vcmp.ne.s32.totalorder %v291, 0
      %vm296 = vcmp.ne.s32.totalorder %v292, 0
      %v297 = vsel %vm293, %v264, -1e+30
      %v298 = vsel %vm294, %v265, -1e+30
      %v299 = vsel %vm295, %v266, -1e+30
      %v300 = vsel %vm296, %v267, -1e+30
      %301 = vmax.xlane.f32.xlu0 %v297
      %v302 = vpop.xlane.xlu0 %301
      %303 = vmax.xlane.f32.xlu0 %v298
      %v304 = vpop.xlane.xlu0 %303
      %305 = vmax.xlane.f32.xlu0 %v299
      %v306 = vpop.xlane.xlu0 %305
      %307 = vmax.xlane.f32.xlu0 %v300
      %v308 = vpop.xlane.xlu0 %307
      %v309 = vsub.f32 %v297, %v302
      %v310 = vsub.f32 %v298, %v304
      %v311 = vsub.f32 %v299, %v306
      %v312 = vsub.f32 %v300, %v308
      %v313 = vpack.c.bf16 %v310, %v309
      %v314 = vpack.c.bf16 %v312, %v311
      %v316 = vmul.bf16 %v313, 1069105081
      %v317 = vpow.bf16.pop %v316
      %v319 = vmul.bf16 %v314, 1069105081
      %v320 = vpow.bf16.pop %v319
      %v321 = vunpack.c.l.bf16 %v317
      %v322 = vunpack.c.h.bf16 %v317
      %v323 = vunpack.c.l.bf16 %v320
      %v324 = vunpack.c.h.bf16 %v320
      %325 = vadd.xlane.f32.xlu0 %v321
      %v326 = vpop.xlane.xlu0 %325
      %327 = vadd.xlane.f32.xlu0 %v322
      %v328 = vpop.xlane.xlu0 %327
      %329 = vadd.xlane.f32.xlu0 %v323
      %v330 = vpop.xlane.xlu0 %329
      %331 = vadd.xlane.f32.xlu0 %v324
      %v332 = vpop.xlane.xlu0 %331
      %v333 = vld [vmem:[%s0] sm:$0xf]
      %v334 = vld [vmem:[%s0 + $0x4] sm:$0xf]
      %v335 = vld [vmem:[%s0 + $0x8] sm:$0xf]
      %v336 = vld [vmem:[%s0 + $0xc] sm:$0xf]
      %v337 = vld [vmem:[%s0 + $0x10] sm:$0xf]
      %v338 = vld [vmem:[%s0 + $0x14] sm:$0xf]
      %v339 = vld [vmem:[%s0 + $0x18] sm:$0xf]
      %v340 = vld [vmem:[%s0 + $0x1c] sm:$0xf]
      %v341 = vld [vmem:[%s0 + $0x20] sm:$0xf]
      %v342 = vld [vmem:[%s0 + $0x24] sm:$0xf]
      %v343 = vld [vmem:[%s0 + $0x28] sm:$0xf]
      %v344 = vld [vmem:[%s0 + $0x2c] sm:$0xf]
      %v345 = vld [vmem:[%s0 + $0x30] sm:$0xf]
      %v346 = vld [vmem:[%s0 + $0x34] sm:$0xf]
      %v347 = vld [vmem:[%s0 + $0x38] sm:$0xf]
      %v348 = vld [vmem:[%s0 + $0x3c] sm:$0xf]
      %v365 = vunpack.c.l.b16 %v333
      %v366 = vunpack.c.l.b16 %v334
      %v367 = vunpack.c.l.b16 %v335
      %v368 = vunpack.c.l.b16 %v336
      %v369 = vunpack.c.l.b16 %v337
      %v370 = vunpack.c.l.b16 %v338
      %v371 = vunpack.c.l.b16 %v339
      %v372 = vunpack.c.l.b16 %v340
      %v373 = vunpack.c.l.b16 %v341
      %v374 = vunpack.c.l.b16 %v342
      %v375 = vunpack.c.l.b16 %v343
      %v376 = vunpack.c.l.b16 %v344
      %v377 = vunpack.c.l.b16 %v345
      %v378 = vunpack.c.l.b16 %v346
      %v379 = vunpack.c.l.b16 %v347
      %v380 = vunpack.c.l.b16 %v348
      %v381 = vpack.c.b16 %v366, %v365
      %v382 = vpack.c.b16 %v368, %v367
      %v383 = vpack.c.b16 %v370, %v369
      %v384 = vpack.c.b16 %v372, %v371
      %v385 = vpack.c.b16 %v374, %v373
      %v386 = vpack.c.b16 %v376, %v375
      %v387 = vpack.c.b16 %v378, %v377
      %v388 = vpack.c.b16 %v380, %v379
      %397 = vmatprep.subr.bf16.mxu0 0
      %398 = vmatpush1.bf16.msra.mxu0 %v381
      %399 = vmatprep.subr.bf16.mxu0 0
      %400 = vmatpush1.bf16.msra.mxu0 %v382
      %401 = vmatprep.subr.bf16.mxu0 0
      %402 = vmatpush1.bf16.msra.mxu0 %v383
      %403 = vmatprep.subr.bf16.mxu0 0
      %404 = vmatpush1.bf16.msra.mxu0 %v384
      %405 = vmatprep.subr.bf16.mxu0 0
      %406 = vmatpush1.bf16.msra.mxu0 %v385
      %407 = vmatprep.subr.bf16.mxu0 0
      %408 = vmatpush1.bf16.msra.mxu0 %v386
      %409 = vmatprep.subr.bf16.mxu0 0
      %410 = vmatpush1.bf16.msra.mxu0 %v387
      %411 = vmatprep.subr.bf16.mxu0 0
      %412 = vmatpush1.bf16.msra.mxu0 %v388
      %413 = vmatprep.subr.bf16.mxu0 0
      %414 = vmatpush1.bf16.msra.mxu0 0
      %415 = vmatprep.subr.bf16.mxu0 0
      %416 = vmatpush1.bf16.msra.mxu0 0
      %417 = vmatprep.subr.bf16.mxu0 0
      %418 = vmatpush1.bf16.msra.mxu0 0
      %419 = vmatprep.subr.bf16.mxu0 0
      %420 = vmatpush1.bf16.msra.mxu0 0
      %421 = vmatprep.subr.bf16.mxu0 0
      %422 = vmatpush1.bf16.msra.mxu0 0
      %423 = vmatprep.subr.bf16.mxu0 0
      %424 = vmatpush1.bf16.msra.mxu0 0
      %425 = vmatprep.subr.bf16.mxu0 0
      %426 = vmatpush1.bf16.msra.mxu0 0
      %427 = vmatprep.subr.bf16.mxu0 0
      %428 = vmatpush1.bf16.msra.mxu0 0
      %429 = vmatprep.mubr.bf16.mxu0 0
      %430 = vmatmul.mubr.bf16.gmra.mrb[0].mxu0 %v317
      %v431 = vpop.f32.mrb[0].mxu0
      %v432 = vadd.f32 0.0, %v431
      %v433 = vpop.f32.mrb[0].mxu0
      %v434 = vpop.f32.mrb[0].mxu0
      %v435 = vadd.f32 0.0, %v434
      %v436 = vpop.f32.mrb[0].mxu0
      %437 = vmatprep.mubr.bf16.mxu0 0
      %438 = vmatmul.mubr.bf16.gmra.mrb[0].mxu0 %v320
      %v439 = vpop.f32.mrb[0].mxu0
      %v440 = vadd.f32 0.0, %v439
      %v441 = vpop.f32.mrb[0].mxu0
      %v442 = vpop.f32.mrb[0].mxu0
      %v443 = vadd.f32 0.0, %v442
      %v444 = vpop.f32.mrb[0].mxu0
      %445 = vdwg.mxu0
      %v446 = vrcp.pop %v326
      %v447 = vrcp.pop %v328
      %v448 = vrcp.pop %v330
      %v449 = vrcp.pop %v332
      %v450 = vmul.f32 %v432, %v446
      %v451 = vmul.f32 %v435, %v447
      %v452 = vmul.f32 %v440, %v448
      %v453 = vmul.f32 %v443, %v449
      %vm454 = vcmp.gt.f32.partialorder %v450, 0.0
      %vm455 = vcmp.gt.f32.partialorder %v451, 0.0
      %vm456 = vcmp.gt.f32.partialorder %v452, 0.0
      %vm457 = vcmp.gt.f32.partialorder %v453, 0.0
      %v458 = vmin.f32 %v450, 0.0
      %v459 = vmin.f32 %v451, 0.0
      %v460 = vmin.f32 %v452, 0.0
      %v461 = vmin.f32 %v453, 0.0
      %v462 = vmul.f32 %v458, 1.442695
      %v463 = vpow.pop %v462
      %v464 = vmul.f32 %v459, 1.442695
      %v465 = vpow.pop %v464
      %v466 = vmul.f32 %v460, 1.442695
      %v467 = vpow.pop %v466
      %v468 = vmul.f32 %v461, 1.442695
      %v469 = vpow.pop %v468
      %v470 = vsub.f32 %v463, 1.0
      %v471 = vsub.f32 %v465, 1.0
      %v472 = vsub.f32 %v467, 1.0
      %v473 = vsub.f32 %v469, 1.0
      %v474 = vsel %vm454, %v450, %v470
      %v475 = vsel %vm455, %v451, %v471
      %v476 = vsel %vm456, %v452, %v472
      %v477 = vsel %vm457, %v453, %v473
      %vm478 = vcmask 130048
      %479 = vst.msk [vmem:[%s216] sm:$0xff] %vm478, %v474
      %480 = vst.msk [vmem:[%s216 + $0x8] sm:$0xff] %vm478, %v475
      %481 = vst.msk [vmem:[%s216 + $0x10] sm:$0xff] %vm478, %v476
      %482 = vst.msk [vmem:[%s216 + $0x18] sm:$0xff] %vm478, %v477
      %v483 = vld [vmem:[%s1 + $0x1] sm:$0x1]
      %v484 = vld [vmem:[%s206] sm:$0xff]
      %v485 = vld [vmem:[%s206 + $0x8] sm:$0xff]
      %v486 = vld [vmem:[%s206 + $0x10] sm:$0xff]
      %v487 = vld [vmem:[%s206 + $0x18] sm:$0xff]
      %v488 = vlaneseq
      %v489 = vshrl.u32 %v488, 7
      %v490 = vsub.s32 0, %v489
      %v491 = vrot.slane %v483, %v490
      %493 = vset.pattern.permute.xlu0 1
      %494 = vperm.xlu0 %493, %v484
      %v495 = vpop.permute.xlu0 %494
      %498 = vset.pattern.permute.xlu0 1
      %499 = vperm.xlu0 %498, %v485
      %v500 = vpop.permute.xlu0 %499
      %503 = vset.pattern.permute.xlu0 1
      %504 = vperm.xlu0 %503, %v486
      %v505 = vpop.permute.xlu0 %504
      %508 = vset.pattern.permute.xlu0 1
      %509 = vperm.xlu0 %508, %v487
      %v510 = vpop.permute.xlu0 %509
      %v512 = vadd.f32 %v491, %v495
      %v513 = vadd.f32 %v491, %v500
      %v514 = vadd.f32 %v491, %v505
      %v515 = vadd.f32 %v491, %v510
      %vm516 = vcmp.gt.f32.partialorder %v512, 0.0
      %vm517 = vcmp.gt.f32.partialorder %v513, 0.0
      %vm518 = vcmp.gt.f32.partialorder %v514, 0.0
      %vm519 = vcmp.gt.f32.partialorder %v515, 0.0
      %v520 = vmul.f32 %v512, 0.2
      %v521 = vmul.f32 %v513, 0.2
      %v522 = vmul.f32 %v514, 0.2
      %v523 = vmul.f32 %v515, 0.2
      %v524 = vsel %vm516, %v512, %v520
      %v525 = vsel %vm517, %v513, %v521
      %v526 = vsel %vm518, %v514, %v522
      %v527 = vsel %vm519, %v515, %v523
      %v528 = vsel %vm293, %v524, -1e+30
      %v529 = vsel %vm294, %v525, -1e+30
      %v530 = vsel %vm295, %v526, -1e+30
      %v531 = vsel %vm296, %v527, -1e+30
      %532 = vmax.xlane.f32.xlu0 %v528
      %v533 = vpop.xlane.xlu0 %532
      %534 = vmax.xlane.f32.xlu0 %v529
      %v535 = vpop.xlane.xlu0 %534
      %536 = vmax.xlane.f32.xlu0 %v530
      %v537 = vpop.xlane.xlu0 %536
      %538 = vmax.xlane.f32.xlu0 %v531
      %v539 = vpop.xlane.xlu0 %538
      %v540 = vsub.f32 %v528, %v533
      %v541 = vsub.f32 %v529, %v535
      %v542 = vsub.f32 %v530, %v537
      %v543 = vsub.f32 %v531, %v539
      %v544 = vpack.c.bf16 %v541, %v540
      %v545 = vpack.c.bf16 %v543, %v542
      %v547 = vmul.bf16 %v544, 1069105081
      %v548 = vpow.bf16.pop %v547
      %v550 = vmul.bf16 %v545, 1069105081
      %v551 = vpow.bf16.pop %v550
      %v552 = vunpack.c.l.bf16 %v548
      %v553 = vunpack.c.h.bf16 %v548
      %v554 = vunpack.c.l.bf16 %v551
      %v555 = vunpack.c.h.bf16 %v551
      %556 = vadd.xlane.f32.xlu0 %v552
      %v557 = vpop.xlane.xlu0 %556
      %558 = vadd.xlane.f32.xlu0 %v553
      %v559 = vpop.xlane.xlu0 %558
      %560 = vadd.xlane.f32.xlu0 %v554
      %v561 = vpop.xlane.xlu0 %560
      %562 = vadd.xlane.f32.xlu0 %v555
      %v563 = vpop.xlane.xlu0 %562
      %s564 = scalar_lea.vmem %s0, 64
      %v565 = vld [vmem:[%s564] sm:$0xf]
      %v566 = vld [vmem:[%s564 + $0x4] sm:$0xf]
      %v567 = vld [vmem:[%s564 + $0x8] sm:$0xf]
      %v568 = vld [vmem:[%s564 + $0xc] sm:$0xf]
      %v569 = vld [vmem:[%s564 + $0x10] sm:$0xf]
      %v570 = vld [vmem:[%s564 + $0x14] sm:$0xf]
      %v571 = vld [vmem:[%s564 + $0x18] sm:$0xf]
      %v572 = vld [vmem:[%s564 + $0x1c] sm:$0xf]
      %v573 = vld [vmem:[%s564 + $0x20] sm:$0xf]
      %v574 = vld [vmem:[%s564 + $0x24] sm:$0xf]
      %v575 = vld [vmem:[%s564 + $0x28] sm:$0xf]
      %v576 = vld [vmem:[%s564 + $0x2c] sm:$0xf]
      %v577 = vld [vmem:[%s564 + $0x30] sm:$0xf]
      %v578 = vld [vmem:[%s564 + $0x34] sm:$0xf]
      %v579 = vld [vmem:[%s564 + $0x38] sm:$0xf]
      %v580 = vld [vmem:[%s564 + $0x3c] sm:$0xf]
      %v597 = vunpack.c.l.b16 %v565
      %v598 = vunpack.c.l.b16 %v566
      %v599 = vunpack.c.l.b16 %v567
      %v600 = vunpack.c.l.b16 %v568
      %v601 = vunpack.c.l.b16 %v569
      %v602 = vunpack.c.l.b16 %v570
      %v603 = vunpack.c.l.b16 %v571
      %v604 = vunpack.c.l.b16 %v572
      %v605 = vunpack.c.l.b16 %v573
      %v606 = vunpack.c.l.b16 %v574
      %v607 = vunpack.c.l.b16 %v575
      %v608 = vunpack.c.l.b16 %v576
      %v609 = vunpack.c.l.b16 %v577
      %v610 = vunpack.c.l.b16 %v578
      %v611 = vunpack.c.l.b16 %v579
      %v612 = vunpack.c.l.b16 %v580
      %v613 = vpack.c.b16 %v598, %v597
      %v614 = vpack.c.b16 %v600, %v599
      %v615 = vpack.c.b16 %v602, %v601
      %v616 = vpack.c.b16 %v604, %v603
      %v617 = vpack.c.b16 %v606, %v605
      %v618 = vpack.c.b16 %v608, %v607
      %v619 = vpack.c.b16 %v610, %v609
      %v620 = vpack.c.b16 %v612, %v611
      %629 = vmatprep.subr.bf16.mxu0 0
      %630 = vmatpush1.bf16.msra.mxu0 %v613
      %631 = vmatprep.subr.bf16.mxu0 0
      %632 = vmatpush1.bf16.msra.mxu0 %v614
      %633 = vmatprep.subr.bf16.mxu0 0
      %634 = vmatpush1.bf16.msra.mxu0 %v615
      %635 = vmatprep.subr.bf16.mxu0 0
      %636 = vmatpush1.bf16.msra.mxu0 %v616
      %637 = vmatprep.subr.bf16.mxu0 0
      %638 = vmatpush1.bf16.msra.mxu0 %v617
      %639 = vmatprep.subr.bf16.mxu0 0
      %640 = vmatpush1.bf16.msra.mxu0 %v618
      %641 = vmatprep.subr.bf16.mxu0 0
      %642 = vmatpush1.bf16.msra.mxu0 %v619
      %643 = vmatprep.subr.bf16.mxu0 0
      %644 = vmatpush1.bf16.msra.mxu0 %v620
      %645 = vmatprep.subr.bf16.mxu0 0
      %646 = vmatpush1.bf16.msra.mxu0 0
      %647 = vmatprep.subr.bf16.mxu0 0
      %648 = vmatpush1.bf16.msra.mxu0 0
      %649 = vmatprep.subr.bf16.mxu0 0
      %650 = vmatpush1.bf16.msra.mxu0 0
      %651 = vmatprep.subr.bf16.mxu0 0
      %652 = vmatpush1.bf16.msra.mxu0 0
      %653 = vmatprep.subr.bf16.mxu0 0
      %654 = vmatpush1.bf16.msra.mxu0 0
      %655 = vmatprep.subr.bf16.mxu0 0
      %656 = vmatpush1.bf16.msra.mxu0 0
      %657 = vmatprep.subr.bf16.mxu0 0
      %658 = vmatpush1.bf16.msra.mxu0 0
      %659 = vmatprep.subr.bf16.mxu0 0
      %660 = vmatpush1.bf16.msra.mxu0 0
      %661 = vmatprep.mubr.bf16.mxu0 0
      %662 = vmatmul.mubr.bf16.gmra.mrb[0].mxu0 %v548
      %v663 = vpop.f32.mrb[0].mxu0
      %v664 = vadd.f32 0.0, %v663
      %v665 = vpop.f32.mrb[0].mxu0
      %v666 = vpop.f32.mrb[0].mxu0
      %v667 = vadd.f32 0.0, %v666
      %v668 = vpop.f32.mrb[0].mxu0
      %669 = vmatprep.mubr.bf16.mxu0 0
      %670 = vmatmul.mubr.bf16.gmra.mrb[0].mxu0 %v551
      %v671 = vpop.f32.mrb[0].mxu0
      %v672 = vadd.f32 0.0, %v671
      %v673 = vpop.f32.mrb[0].mxu0
      %v674 = vpop.f32.mrb[0].mxu0
      %v675 = vadd.f32 0.0, %v674
      %v676 = vpop.f32.mrb[0].mxu0
      %677 = vdwg.mxu0
      %v678 = vrcp.pop %v557
      %v679 = vrcp.pop %v559
      %v680 = vrcp.pop %v561
      %v681 = vrcp.pop %v563
      %v682 = vmul.f32 %v664, %v678
      %v683 = vmul.f32 %v667, %v679
      %v684 = vmul.f32 %v672, %v680
      %v685 = vmul.f32 %v675, %v681
      %vm686 = vcmp.gt.f32.partialorder %v682, 0.0
      %vm687 = vcmp.gt.f32.partialorder %v683, 0.0
      %vm688 = vcmp.gt.f32.partialorder %v684, 0.0
      %vm689 = vcmp.gt.f32.partialorder %v685, 0.0
      %v690 = vmin.f32 %v682, 0.0
      %v691 = vmin.f32 %v683, 0.0
      %v692 = vmin.f32 %v684, 0.0
      %v693 = vmin.f32 %v685, 0.0
      %v694 = vmul.f32 %v690, 1.442695
      %v695 = vpow.pop %v694
      %v696 = vmul.f32 %v691, 1.442695
      %v697 = vpow.pop %v696
      %v698 = vmul.f32 %v692, 1.442695
      %v699 = vpow.pop %v698
      %v700 = vmul.f32 %v693, 1.442695
      %v701 = vpow.pop %v700
      %v702 = vsub.f32 %v695, 1.0
      %v703 = vsub.f32 %v697, 1.0
      %v704 = vsub.f32 %v699, 1.0
      %v705 = vsub.f32 %v701, 1.0
      %v706 = vsel %vm686, %v682, %v702
      %v707 = vsel %vm687, %v683, %v703
      %v708 = vsel %vm688, %v684, %v704
      %v709 = vsel %vm689, %v685, %v705
      %714 = vrot.lane.b32.xlu0 %v706, 16
      %v715 = vpop.permute.xlu0 %714
      %716 = vrot.lane.b32.xlu0 %v707, 16
      %v717 = vpop.permute.xlu0 %716
      %718 = vrot.lane.b32.xlu0 %v708, 16
      %v719 = vpop.permute.xlu0 %718
      %720 = vrot.lane.b32.xlu0 %v709, 16
      %v721 = vpop.permute.xlu0 %720
      %vm726 = vcmask 261248
      %727 = vst.msk [vmem:[%s216] sm:$0xff] %vm726, %v715
      %728 = vst.msk [vmem:[%s216 + $0x8] sm:$0xff] %vm726, %v717
      %729 = vst.msk [vmem:[%s216 + $0x10] sm:$0xff] %vm726, %v719
      %730 = vst.msk [vmem:[%s216 + $0x18] sm:$0xff] %vm726, %v721
      %s731 = smul.u32 4, %s15
      %p732 = scmp.lt.s32.totalorder %s731, 7
      %s733 = scalar_select %p732, %s731, 7
      %s734 = smul.addr %s733, 8
      %s735 = scalar_lea.vmem %s4, %s734
      // Predicated region
      $region37: #{tpu_custom_call.1} parent=35 // pred_check
        %p736 = pneg %p127
      $region38: #{tpu_custom_call.1} parent=35 // pred_check_branch
        %738 = sbr.rel (%p736) target = $region40
      $region39: #{tpu_custom_call.1} parent=35 // pred_region
        %s739 = smul.u32 4, %s15
      $region40: #{tpu_custom_call.1} parent=35 // pred_fallthru
        _
    $region36: #{tpu_custom_call.1} parent=5 // pred_fallthru
      _
    %p740 = scmp.le.s32.totalorder 2, %s10
    // Predicated region
    $region41: #{tpu_custom_call.1} parent=5 // pred_check
      %p741 = pneg %p740
    $region42: #{tpu_custom_call.1} parent=5 // pred_check_branch
      %743 = sbr.rel (%p741) target = $region44
    $region43: #{tpu_custom_call.1} parent=5 // pred_region
      %s744 = ssub.s32 %s10, 2
      // Predicated region
      $region45: #{tpu_custom_call.1} parent=43 // pred_check
        %p745 = pneg %p133
      $region46: #{tpu_custom_call.1} parent=43 // pred_check_branch
        %747 = sbr.rel (%p745) target = $region48
      $region47: #{tpu_custom_call.1} parent=43 // pred_region
        %s748 = smul.u32 4, %s16
        %p749 = scmp.lt.s32.totalorder %s748, 7
        %s750 = scalar_select %p749, %s748, 7
        %s751 = smul.addr %s750, 8
        %s752 = scalar_lea.vmem %s4, %s751
      $region48: #{tpu_custom_call.1} parent=43 // pred_fallthru
        _
    $region44: #{tpu_custom_call.1} parent=5 // pred_fallthru
      _
  $region6: #{tpu_custom_call.1} parent=0 // loop_footer
    %s14 = sadd.s32 1, %s10
  $region7: #{tpu_custom_call.1} parent=0 // loop_footer_branch
    %9 = sbr.rel target = $region3
  $region8: #{tpu_custom_call.1} parent=0 // loop_exit
    _

</llo_original>
